<compile_context>
chip_gen: v5e
topology: v5e:2x2
jax: 0.10.0
libtpu: 0.0.40
codegen_flags: <defaults>
</compile_context>

<pallas_src>
import functools
import math

import jax
import jax.numpy as jnp
from jax import lax
from jax.experimental import pallas as pl
from jax.experimental.pallas import tpu as pltpu


# ------------------------------- tiling helpers -------------------------------

@functools.lru_cache(maxsize=None)
def _vmem_limit_bytes():
    """Generation-aware scoped-VMEM budget (~3/4 of physical, capped at 100 MiB)."""
    try:
        cap = int(pltpu.get_tpu_info().vmem_capacity_bytes)
        return max(32 * 1024 * 1024, min(cap * 3 // 4, 100 * 1024 * 1024))
    except Exception:
        return 32 * 1024 * 1024  # conservative default, safe on every generation


def _row_tile(m, target=512):
    """Row tile for the mem-bound projections (big tiles -> closer to HBM roofline)."""
    if m <= target:
        return m
    return target  # multiple of 8; ragged tail handled by the cdiv grid (masked writes)


def _q_tile(L, target=256):
    """Query-row tile for the attention kernel (bounds [tq, S] scores in VMEM)."""
    if L <= target:
        return L
    return target  # multiple of 8; ragged tail handled by the cdiv grid


# ----------------------------- Pallas kernels -----------------------------

def _qkv_proj_kernel(x_ref, w_ref, b_ref, q_ref, k_ref, v_ref, *, compute_dtype):
    # Fused Q/K/V projection: one [TM, D] x [D, 2*Dk + Dv] matmul per tile,
    # split into three outputs (no extra HBM round-trip for the split).
    cdt = compute_dtype
    acc = jnp.dot(x_ref[...].astype(cdt), w_ref[...].astype(cdt),
                  preferred_element_type=jnp.float32)
    acc = acc + b_ref[...].astype(jnp.float32)
    dk = q_ref.shape[-1]
    dv = v_ref.shape[-1]
    q_ref[...] = acc[:, :dk].astype(q_ref.dtype)
    k_ref[...] = acc[:, dk:2 * dk].astype(k_ref.dtype)
    v_ref[...] = acc[:, 2 * dk:2 * dk + dv].astype(v_ref.dtype)


def _linear_kernel(x_ref, w_ref, b_ref, o_ref, *, compute_dtype):
    # Generic tiled linear (cross-attention / separate-input path).
    cdt = compute_dtype
    acc = jnp.dot(x_ref[...].astype(cdt), w_ref[...].astype(cdt),
                  preferred_element_type=jnp.float32) + b_ref[...].astype(jnp.float32)
    o_ref[...] = acc.astype(o_ref.dtype)


def _attn_out_kernel(q_ref, k_ref, v_ref, wo_ref, bo_ref, o_ref, *rest,
                     n_heads, scale, compute_dtype, output_attention):
    """Fused multi-head attention + output projection for one (batch, q-tile) block.

    Block shapes (leading batch dim squeezed away by BlockSpec):
      q_ref : [tq, H*dk]   k_ref : [S, H*dk]   v_ref : [S, H*dv]
      wo_ref: [H*dv, D]    bo_ref: [1, D]      o_ref : [tq, D]
      attn_ref (optional output): [H, tq, S]
      ctx_ref (VMEM scratch): [tq, H*dv] f32 slab of per-head context vectors.
    """
    if output_attention:
        attn_ref, ctx_ref = rest
    else:
        (ctx_ref,) = rest
        attn_ref = None

    H = n_heads
    dk = q_ref.shape[-1] // H
    dv = v_ref.shape[-1] // H
    cdt = compute_dtype

    # Fold 1/sqrt(dk) into q (O(tq*H*dk) VPU work instead of O(H*tq*S)).
    q = (q_ref[...].astype(jnp.float32) * scale).astype(cdt)
    k = k_ref[...].astype(cdt)
    v = v_ref[...].astype(cdt)

    # TODO(synk): for large H, replace the static head unroll with a fori_loop /
    #             head-major layout so per-head lane slices do not materialize copies.
    for h in range(H):
        qh = q[:, h * dk:(h + 1) * dk]              # [tq, dk]
        kh = k[:, h * dk:(h + 1) * dk]              # [S, dk]
        vh = v[:, h * dv:(h + 1) * dv]              # [S, dv]
        # scores = qh @ kh^T (contract last dims; f32 accumulation on the MXU)
        s = lax.dot_general(qh, kh, (((1,), (1,)), ((), ())),
                            preferred_element_type=jnp.float32)        # [tq, S]
        m = jnp.max(s, axis=-1, keepdims=True)
        e = jnp.exp(s - m)
        denom = jnp.sum(e, axis=-1, keepdims=True)
        # Deferred normalization: PV matmul on the un-normalized exponentials, then
        # scale the [tq, dv] context rows (EUP reciprocal) instead of [tq, S] probs.
        ctx = jnp.dot(e.astype(cdt), vh, preferred_element_type=jnp.float32)
        ctx_ref[:, h * dv:(h + 1) * dv] = ctx * pl.reciprocal(denom, approx=True)
        if output_attention:
            # Exact divide for the returned probabilities (they must sum to 1).
            attn_ref[h] = (e / denom).astype(attn_ref.dtype)

    # Single full-width output projection: [tq, H*dv] @ [H*dv, D] (+ bias).
    out = jnp.dot(ctx_ref[...].astype(cdt), wo_ref[...].astype(cdt),
                  preferred_element_type=jnp.float32)
    o_ref[...] = (out + bo_ref[...].astype(jnp.float32)).astype(o_ref.dtype)


# --------------------------- pallas_call wrappers ---------------------------

def qkv_projection(x2d, wqkv, bqkv, dk_total, dv_total, out_dtype, compute_dtype):
    M, D = x2d.shape
    N = wqkv.shape[1]
    tm = _row_tile(M)
    kern = functools.partial(_qkv_proj_kernel, compute_dtype=compute_dtype)
    cost = pl.CostEstimate(flops=2 * M * D * N, transcendentals=0,
                           bytes_accessed=4 * (M * D + D * N + M * N))
    return pl.pallas_call(
        kern,
        grid=(pl.cdiv(M, tm),),
        out_shape=(jax.ShapeDtypeStruct((M, dk_total), out_dtype),
                   jax.ShapeDtypeStruct((M, dk_total), out_dtype),
                   jax.ShapeDtypeStruct((M, dv_total), out_dtype)),
        in_specs=[pl.BlockSpec((tm, D), lambda i: (i, 0)),
                  pl.BlockSpec((D, N), lambda i: (0, 0)),
                  pl.BlockSpec((1, N), lambda i: (0, 0))],
        out_specs=(pl.BlockSpec((tm, dk_total), lambda i: (i, 0)),
                   pl.BlockSpec((tm, dk_total), lambda i: (i, 0)),
                   pl.BlockSpec((tm, dv_total), lambda i: (i, 0))),
        compiler_params=pltpu.CompilerParams(
            dimension_semantics=("parallel",),
            vmem_limit_bytes=_vmem_limit_bytes()),
        cost_estimate=cost,
    )(x2d, wqkv, bqkv.reshape(1, N))


def linear(x2d, w, b, out_dtype, compute_dtype):
    M, K = x2d.shape
    N = w.shape[1]
    tm = _row_tile(M)
    kern = functools.partial(_linear_kernel, compute_dtype=compute_dtype)
    cost = pl.CostEstimate(flops=2 * M * K * N, transcendentals=0,
                           bytes_accessed=4 * (M * K + K * N + M * N))
    return pl.pallas_call(
        kern,
        grid=(pl.cdiv(M, tm),),
        out_shape=jax.ShapeDtypeStruct((M, N), out_dtype),
        in_specs=[pl.BlockSpec((tm, K), lambda i: (i, 0)),
                  pl.BlockSpec((K, N), lambda i: (0, 0)),
                  pl.BlockSpec((1, N), lambda i: (0, 0))],
        out_specs=pl.BlockSpec((tm, N), lambda i: (i, 0)),
        compiler_params=pltpu.CompilerParams(
            dimension_semantics=("parallel",),
            vmem_limit_bytes=_vmem_limit_bytes()),
        cost_estimate=cost,
    )(x2d, w, b.reshape(1, N))


def attention_and_out_projection(q3, k3, v3, wo, bo, n_heads, scale, out_dtype,
                                 output_attention, compute_dtype):
    B, L, DK = q3.shape
    _, S, _ = k3.shape
    DV = v3.shape[-1]
    D = wo.shape[1]
    H = n_heads
    dk = DK // H
    dv = DV // H
    tq = _q_tile(L)

    kern = functools.partial(_attn_out_kernel, n_heads=H, scale=scale,
                             compute_dtype=compute_dtype,
                             output_attention=output_attention)

    out_shape = [jax.ShapeDtypeStruct((B, L, D), out_dtype)]
    out_specs = [pl.BlockSpec((pl.Squeezed(), tq, D), lambda b, i: (b, i, 0))]
    if output_attention:
        out_shape.append(jax.ShapeDtypeStruct((B, H, L, S), jnp.float32))
        out_specs.append(pl.BlockSpec((pl.Squeezed(), H, tq, S),
                                      lambda b, i: (b, 0, i, 0)))

    in_bytes = int((q3.size + k3.size + v3.size) * q3.dtype.itemsize)
    cost = pl.CostEstimate(
        flops=2 * B * H * L * S * (dk + dv) + 2 * B * L * DV * D,
        transcendentals=B * H * L * S,
        bytes_accessed=in_bytes + 4 * (DV * D + B * L * D)
                       + (4 * B * H * L * S if output_attention else 0),
    )

    res = pl.pallas_call(
        kern,
        grid=(B, pl.cdiv(L, tq)),
        out_shape=tuple(out_shape),
        in_specs=[
            pl.BlockSpec((pl.Squeezed(), tq, DK), lambda b, i: (b, i, 0)),
            pl.BlockSpec((pl.Squeezed(), S, DK), lambda b, i: (b, 0, 0)),
            pl.BlockSpec((pl.Squeezed(), S, DV), lambda b, i: (b, 0, 0)),
            pl.BlockSpec((DV, D), lambda b, i: (0, 0)),
            pl.BlockSpec((1, D), lambda b, i: (0, 0)),
        ],
        out_specs=tuple(out_specs),
        scratch_shapes=[pltpu.VMEM((tq, DV), jnp.float32)],   # per-head ctx slab
        compiler_params=pltpu.CompilerParams(
            dimension_semantics=("parallel", "parallel"),
            vmem_limit_bytes=_vmem_limit_bytes()),
        cost_estimate=cost,
    )(q3, k3, v3, wo, bo.reshape(1, D))

    if output_attention:
        return res[0], res[1]
    return res[0], None


# ------------------------------ AttentionLayer forward ------------------------------

def prepare_params(params):
    """Hoist the QKV weight/bias concatenation out of the forward pass."""
    p = dict(params)
    p["wqkv"] = jnp.concatenate([p["wq"], p["wk"], p["wv"]], axis=1)
    p["bqkv"] = jnp.concatenate([p["bq"], p["bk"], p["bv"]], axis=0)
    return p


def attention_layer_forward(queries, keys, values, params, n_heads,
                            output_attention=True, compute_dtype=jnp.float32,
                            self_attention=None):
    """Matches AttentionLayer.forward (attn_mask=tau=delta=None, eval mode)."""
    B, L, D = queries.shape
    _, S, _ = keys.shape
    dk_total = params["wq"].shape[1]
    dv_total = params["wv"].shape[1]
    # NOTE: with compute_dtype=bf16 the q/k/v intermediates are stored in bf16 too
    # (halves HBM traffic between kernels; precision loss before the softmax).
    act_dtype = compute_dtype

    if self_attention is None:
        # Identity check fails under jit with three separate-but-equal args; pass
        # self_attention=True explicitly there to keep the fused-QKV fast path.
        self_attention = (queries is keys) and (keys is values)

    if self_attention:
        wqkv = params.get("wqkv")
        bqkv = params.get("bqkv")
        if wqkv is None:   # fallback; prefer prepare_params() to pre-fuse once
            wqkv = jnp.concatenate([params["wq"], params["wk"], params["wv"]], axis=1)
            bqkv = jnp.concatenate([params["bq"], params["bk"], params["bv"]], axis=0)
        q2, k2, v2 = qkv_projection(queries.reshape(B * L, D), wqkv, bqkv,
                                    dk_total, dv_total, act_dtype, compute_dtype)
        q3 = q2.reshape(B, L, dk_total)
        k3 = k2.reshape(B, S, dk_total)
        v3 = v2.reshape(B, S, dv_total)
    else:
        q3 = linear(queries.reshape(B * L, D), params["wq"], params["bq"],
                    act_dtype, compute_dtype).reshape(B, L, dk_total)
        k3 = linear(keys.reshape(B * S, D), params["wk"], params["bk"],
                    act_dtype, compute_dtype).reshape(B, S, dk_total)
        v3 = linear(values.reshape(B * S, D), params["wv"], params["bv"],
                    act_dtype, compute_dtype).reshape(B, S, dv_total)

    scale = 1.0 / math.sqrt(dk_total // n_heads)
    return attention_and_out_projection(q3, k3, v3, params["wo"], params["bo"],
                                        n_heads, scale, queries.dtype,
                                        output_attention, compute_dtype)


# --------------------------- Reference (pure JAX) ---------------------------

def ref_attention_layer(queries, keys, values, params, n_heads):
    B, L, _ = queries.shape
    _, S, _ = keys.shape
    H = n_heads
    q = (queries @ params["wq"] + params["bq"]).reshape(B, L, H, -1)
    k = (keys @ params["wk"] + params["bk"]).reshape(B, S, H, -1)
    v = (values @ params["wv"] + params["bv"]).reshape(B, S, H, -1)
    E = q.shape[-1]
    s = jnp.einsum("blhe,bshe->bhls", q, k) / math.sqrt(E)
    a = jax.nn.softmax(s, axis=-1)
    o = jnp.einsum("bhls,bshd->blhd", a, v).reshape(B, L, -1)
    return o @ params["wo"] + params["bo"], a


# ------------------------------ Param init ----------------------------------

def init_params(key, d_model, n_heads, d_keys=None, d_values=None):
    d_keys = d_keys or d_model // n_heads
    d_values = d_values or d_model // n_heads
    ks = jax.random.split(key, 8)
    def w(k, shape): return 0.05 * jax.random.normal(k, shape, jnp.float32)
    def b(k, n): return 0.01 * jax.random.normal(k, (n,), jnp.float32)
    return {
        "wq": w(ks[0], (d_model, d_keys * n_heads)),   "bq": b(ks[1], d_keys * n_heads),
        "wk": w(ks[2], (d_model, d_keys * n_heads)),   "bk": b(ks[3], d_keys * n_heads),
        "wv": w(ks[4], (d_model, d_values * n_heads)), "bv": b(ks[5], d_values * n_heads),
        "wo": w(ks[6], (d_values * n_heads, d_model)), "bo": b(ks[7], d_model),
    }


# --------------------------------- main --------------------------------------

if __name__ == "__main__":
    B, L, d_model, n_heads = 2, 8, 32, 4

    key = jax.random.PRNGKey(0)
    kx, kp = jax.random.split(key)
    x = jax.random.normal(kx, (B, L, d_model), jnp.float32)
    params = prepare_params(init_params(kp, d_model, n_heads))

    # --- self-attention, f32 compute, attention probabilities returned ---
    out, attn = attention_layer_forward(x, x, x, params, n_heads, output_attention=True)
    out = jax.block_until_ready(out)
    attn = jax.block_until_ready(attn)

    ref_out, ref_attn = ref_attention_layer(x, x, x, params, n_heads)
    assert out.shape == (B, L, d_model)
    assert attn.shape == (B, n_heads, L, L)
    assert jnp.allclose(out, ref_out, atol=2e-3, rtol=2e-3)
    assert jnp.allclose(attn, ref_attn, atol=2e-3, rtol=2e-3)

    # --- cross-attention (separate q/k/v inputs, S != L), no attn output ---
    kq, kk, kv = jax.random.split(jax.random.fold_in(key, 7), 3)
    S = 16
    q_in = jax.random.normal(kq, (B, L, d_model), jnp.float32)
    k_in = jax.random.normal(kk, (B, S, d_model), jnp.float32)
    v_in = jax.random.normal(kv, (B, S, d_model), jnp.float32)
    out2, attn2 = attention_layer_forward(q_in, k_in, v_in, params, n_heads,
                                          output_attention=False)
    out2 = jax.block_until_ready(out2)
    ref_out2, _ = ref_attention_layer(q_in, k_in, v_in, params, n_heads)
    assert attn2 is None
    assert jnp.allclose(out2, ref_out2, atol=2e-3, rtol=2e-3)

    # --- bf16 MXU compute path (f32 accumulation), loose tolerance ---
    out_bf, _ = attention_layer_forward(x, x, x, params, n_heads,
                                        output_attention=False,
                                        compute_dtype=jnp.bfloat16)
    out_bf = jax.block_until_ready(out_bf)
    assert bool(jnp.all(jnp.isfinite(out_bf.astype(jnp.float32))))
    assert jnp.allclose(out_bf.astype(jnp.float32), ref_out, atol=1e-1, rtol=1e-1)

    print("KERNEL_OK")
</pallas_src>

<mosaic_0001>
module attributes {stable_mosaic.version = 11 : i64} {
  func.func @_qkv_proj_kernel(%arg0: i32, %arg1: memref<16x32xf32, #tpu.memory_space<vmem>>, %arg2: memref<32x96xf32, #tpu.memory_space<vmem>>, %arg3: memref<1x96xf32, #tpu.memory_space<vmem>>, %arg4: memref<16x32xf32, #tpu.memory_space<vmem>>, %arg5: memref<16x32xf32, #tpu.memory_space<vmem>>, %arg6: memref<16x32xf32, #tpu.memory_space<vmem>>) attributes {dimension_semantics = [#tpu.dimension_semantics<parallel>], iteration_bounds = array<i64: 1>, scalar_prefetch = 0 : i64, scratch_operands = 0 : i64, tpu.core_type = #tpu.core_type<tc>, window_params = [{transform_indices = @transform_0, window_bounds = array<i64: 16, 32>}, {pipeline_mode = #tpu.pipeline_mode<synchronous>, transform_indices = @transform_1, window_bounds = array<i64: 32, 96>}, {pipeline_mode = #tpu.pipeline_mode<synchronous>, transform_indices = @transform_2, window_bounds = array<i64: 1, 96>}, {transform_indices = @transform_3, window_bounds = array<i64: 16, 32>}, {transform_indices = @transform_4, window_bounds = array<i64: 16, 32>}, {transform_indices = @transform_5, window_bounds = array<i64: 16, 32>}]} {
    %c0 = arith.constant 0 : index
    %c0_0 = arith.constant 0 : index
    %0 = vector.load %arg1[%c0, %c0_0] : memref<16x32xf32, #tpu.memory_space<vmem>>, vector<16x32xf32>
    %c0_1 = arith.constant 0 : index
    %c0_2 = arith.constant 0 : index
    %1 = vector.load %arg2[%c0_1, %c0_2] : memref<32x96xf32, #tpu.memory_space<vmem>>, vector<32x96xf32>
    %cst = arith.constant dense<0.000000e+00> : vector<16x96xf32>
    %2 = tpu.matmul %0, %1, %cst {dimension_numbers = #tpu.dot_dimension_numbers<[1], [0], [0], [1], [0, 0, 1, 1], [], []>} : vector<16x32xf32>, vector<32x96xf32>, vector<16x96xf32> -> vector<16x96xf32>
    %c0_3 = arith.constant 0 : index
    %c0_4 = arith.constant 0 : index
    %3 = vector.load %arg3[%c0_3, %c0_4] : memref<1x96xf32, #tpu.memory_space<vmem>>, vector<1x96xf32>
    %4 = vector.broadcast %3 : vector<1x96xf32> to vector<16x96xf32>
    %5 = arith.addf %2, %4 : vector<16x96xf32>
    %6 = vector.extract_strided_slice %5 {offsets = [0, 0], sizes = [16, 32], strides = [1, 1]} : vector<16x96xf32> to vector<16x32xf32>
    %c0_5 = arith.constant 0 : index
    %c0_6 = arith.constant 0 : index
    %7 = vector.load %arg4[%c0_5, %c0_6] : memref<16x32xf32, #tpu.memory_space<vmem>>, vector<16x32xf32>
    tpu.vector_store %arg4[%c0_5, %c0_6], %6 {strides = array<i32>} : memref<16x32xf32, #tpu.memory_space<vmem>>, vector<16x32xf32>,
    %8 = vector.extract_strided_slice %5 {offsets = [0, 32], sizes = [16, 32], strides = [1, 1]} : vector<16x96xf32> to vector<16x32xf32>
    %c0_7 = arith.constant 0 : index
    %c0_8 = arith.constant 0 : index
    %9 = vector.load %arg5[%c0_7, %c0_8] : memref<16x32xf32, #tpu.memory_space<vmem>>, vector<16x32xf32>
    tpu.vector_store %arg5[%c0_7, %c0_8], %8 {strides = array<i32>} : memref<16x32xf32, #tpu.memory_space<vmem>>, vector<16x32xf32>,
    %10 = vector.extract_strided_slice %5 {offsets = [0, 64], sizes = [16, 32], strides = [1, 1]} : vector<16x96xf32> to vector<16x32xf32>
    %c0_9 = arith.constant 0 : index
    %c0_10 = arith.constant 0 : index
    %11 = vector.load %arg6[%c0_9, %c0_10] : memref<16x32xf32, #tpu.memory_space<vmem>>, vector<16x32xf32>
    tpu.vector_store %arg6[%c0_9, %c0_10], %10 {strides = array<i32>} : memref<16x32xf32, #tpu.memory_space<vmem>>, vector<16x32xf32>,
    return
  }
  func.func @transform_0(%arg0: i32) -> (i32, i32) {
    %c0_i32 = arith.constant 0 : i32
    %c0_i32_0 = arith.constant 0 : i32
    return %arg0, %c0_i32 : i32, i32
  }
  func.func @transform_1(%arg0: i32) -> (i32, i32) {
    %c0_i32 = arith.constant 0 : i32
    %c0_i32_0 = arith.constant 0 : i32
    %c0_i32_1 = arith.constant 0 : i32
    return %c0_i32, %c0_i32_0 : i32, i32
  }
  func.func @transform_2(%arg0: i32) -> (i32, i32) {
    %c0_i32 = arith.constant 0 : i32
    %c0_i32_0 = arith.constant 0 : i32
    %c0_i32_1 = arith.constant 0 : i32
    return %c0_i32, %c0_i32_0 : i32, i32
  }
  func.func @transform_3(%arg0: i32) -> (i32, i32) {
    %c0_i32 = arith.constant 0 : i32
    %c0_i32_0 = arith.constant 0 : i32
    return %arg0, %c0_i32 : i32, i32
  }
  func.func @transform_4(%arg0: i32) -> (i32, i32) {
    %c0_i32 = arith.constant 0 : i32
    %c0_i32_0 = arith.constant 0 : i32
    return %arg0, %c0_i32 : i32, i32
  }
  func.func @transform_5(%arg0: i32) -> (i32, i32) {
    %c0_i32 = arith.constant 0 : i32
    %c0_i32_0 = arith.constant 0 : i32
    return %arg0, %c0_i32 : i32, i32
  }
}

</mosaic_0001>

<llo_original>
// kernel: tpu_custom_call.1
$region0: #{tpu_custom_call.1}
  #allocation0 [shape = 'u32[]', space=smem, size = 0x4, offset = 0x4, fixed_abs, tag = 'smem constant byte address 0x4 - core index']
  #allocation1 [shape = 'u32[72,128]{1,0:T(1,128)}', space=vmem, size = 0x9000, scoped, tag = 'internal scratch']
  %s0 = inlined_call_operand.hbm [shape: f32[16,32], index: 0, kind: input, shape index: {}]
  %s1 = inlined_call_operand.hbm [shape: f32[32,96], index: 1, kind: input, shape index: {}]
  %s2 = inlined_call_operand.vmem [shape: f32[1,96], index: 2, kind: input, shape index: {}]
  %s3 = inlined_call_operand.hbm [shape: f32[16,32], index: 3, kind: output, shape index: {0}]
  %s4 = inlined_call_operand.hbm [shape: f32[16,32], index: 4, kind: output, shape index: {1}]
  %s5 = inlined_call_operand.hbm [shape: f32[16,32], index: 5, kind: output, shape index: {2}]
  %6 = xla_tuple %s3, %s4, %s5
  %s7 = sld [smem:[#allocation0]]
  $region46: #{tpu_custom_call.1} parent=0
    _
  %s9 = ssub.s32 1, %s7
  %s10 = scalar_select 0, %s9, %s7
  $region1: #{tpu_custom_call.1} parent=0
    #allocation2 [shape = 'u8[8192]{0}', space=vmem, size = 0x2000, scoped, tag = 'input window, operand 0, single buffered']
    #allocation3 [shape = 's32[1]{0}', space=sflag, size = 0x4, scoped, tag = 'scoped memory for tpu_custom_call.1']
    #allocation4 [shape = 's32[1]{0}', space=sflag, size = 0x4, scoped, tag = 'scoped memory for tpu_custom_call.1']
    #allocation5 [shape = 'u8[16384]{0}', space=vmem, size = 0x4000, scoped, tag = 'input window, operand 1, single buffered']
    #allocation6 [shape = 's32[1]{0}', space=sflag, size = 0x4, scoped, tag = 'scoped memory for tpu_custom_call.1']
    #allocation7 [shape = 'u8[8192]{0}', space=vmem, size = 0x2000, scoped, tag = 'output window, operand 0, single buffered']
    #allocation8 [shape = 'u8[8192]{0}', space=vmem, size = 0x2000, scoped, tag = 'output window, operand 1, single buffered']
    #allocation9 [shape = 's32[1]{0}', space=sflag, size = 0x4, scoped, tag = 'scoped memory for tpu_custom_call.1']
    #allocation10 [shape = 'u8[8192]{0}', space=vmem, size = 0x2000, scoped, tag = 'output window, operand 2, single buffered']
    %11 = vsyncpa [#allocation3], 0
    %12 = vsyncpa [#allocation6], 0
    %13 = vsyncpa [#allocation4], 0
    %14 = vsyncpa [#allocation9], 0
    // Predicated region
    $region2: #{tpu_custom_call.1} parent=1 // pred_check
      _
    $region3: #{tpu_custom_call.1} parent=1 // pred_check_branch
      %16 = sbr.rel (0) target = $region5
    $region4: #{tpu_custom_call.1} parent=1 // pred_region
      %18 = vsyncadd [#allocation3], 0
      %s19 = sshll.u32 %s0, 4
      %s20 = int_to_ptr.hbm [resolvable:$true] %s19
      %s21 = sshll.u32 [#allocation2], 4
      %s22 = int_to_ptr.vmem [resolvable:$true] %s21
      %27 = dma.hbm_to_vmem [thread:$0]  %s20, 256, %s22, [#allocation3], 128, 128, 8
    $region5: #{tpu_custom_call.1} parent=1 // pred_fallthru
      _
    // Predicated region
    $region6: #{tpu_custom_call.1} parent=1 // pred_check
      _
    $region7: #{tpu_custom_call.1} parent=1 // pred_check_branch
      %29 = sbr.rel (0) target = $region9
    $region8: #{tpu_custom_call.1} parent=1 // pred_region
      %31 = vsyncadd [#allocation6], 0
      %s32 = sshll.u32 %s1, 4
      %s33 = int_to_ptr.hbm [resolvable:$true] %s32
      %s34 = sshll.u32 [#allocation5], 4
      %s35 = int_to_ptr.vmem [resolvable:$true] %s34
      %40 = dma.hbm_to_vmem [thread:$0]  %s33, 512, %s35, [#allocation6], 128, 128, 8
    $region9: #{tpu_custom_call.1} parent=1 // pred_fallthru
      _
    // Predicated region
    $region10: #{tpu_custom_call.1} parent=1 // pred_check
      _
    $region11: #{tpu_custom_call.1} parent=1 // pred_check_branch
      %42 = sbr.rel (0) target = $region13
    $region12: #{tpu_custom_call.1} parent=1 // pred_region
      _
    $region13: #{tpu_custom_call.1} parent=1 // pred_fallthru
      _
    // Predicated region
    $region14: #{tpu_custom_call.1} parent=1 // pred_check
      _
    $region15: #{tpu_custom_call.1} parent=1 // pred_check_branch
      %44 = sbr.rel (0) target = $region17
    $region16: #{tpu_custom_call.1} parent=1 // pred_region
      %46 = dma.done [#allocation3], 256
    $region17: #{tpu_custom_call.1} parent=1 // pred_fallthru
      _
    // Predicated region
    $region18: #{tpu_custom_call.1} parent=1 // pred_check
      _
    $region19: #{tpu_custom_call.1} parent=1 // pred_check_branch
      %48 = sbr.rel (0) target = $region21
    $region20: #{tpu_custom_call.1} parent=1 // pred_region
      %50 = dma.done [#allocation6], 512
    $region21: #{tpu_custom_call.1} parent=1 // pred_fallthru
      _
    %v51 = vld [vmem:[#allocation2] sm:$0xff]
    %v52 = vld [vmem:[#allocation2 + $0x8] sm:$0xff]
    %v53 = vld [vmem:[#allocation5] sm:$0xff]
    %v54 = vld [vmem:[#allocation5 + $0x8] sm:$0xff]
    %v55 = vld [vmem:[#allocation5 + $0x10] sm:$0xff]
    %v56 = vld [vmem:[#allocation5 + $0x18] sm:$0xff]
    %v57 = vld [vmem:[%s2] sm:$0x1]
    %v59 = vperm.slane %v57, 0
    %vm61 = vcmask 261120
    %v63 = vsel %vm61, %v51, 0
    %v66 = vsel %vm61, %v52, 0
    %68 = vmatpush.msra.mxu0 0.0
    %69 = vmatpush.msra.mxu0 0.0
    %70 = vmatpush.msra.mxu0 0.0
    %71 = vmatpush.msra.mxu0 0.0
    %72 = vmatpush.msra.mxu0 0.0
    %73 = vmatpush.msra.mxu0 0.0
    %74 = vmatpush.msra.mxu0 0.0
    %75 = vmatpush.msra.mxu0 0.0
    %76 = vmatpush.msra.mxu0 0.0
    %77 = vmatpush.msra.mxu0 0.0
    %78 = vmatpush.msra.mxu0 0.0
    %79 = vmatpush.msra.mxu0 0.0
    %80 = vmatpush.msra.mxu0 %v56
    %81 = vmatpush.msra.mxu0 %v55
    %82 = vmatpush.msra.mxu0 %v54
    %83 = vmatpush.msra.mxu0 %v53
    %84 = vmatmul.f32.gmra.mxu0 %v63
    %v85 = vpop.f32.mrf.mxu0
    %v86 = vadd.f32 %v59, %v85
    %87 = vmatmul.f32.gmra.mxu0 %v66
    %v88 = vpop.f32.mrf.mxu0
    %v89 = vadd.f32 %v59, %v88
    %90 = vdwg.mxu0
    %91 = vst.msk [vmem:[#allocation7] sm:$0xff] %vm61, %v86
    %92 = vst.msk [vmem:[#allocation7 + $0x8] sm:$0xff] %vm61, %v89
    %95 = vrot.lane.b32.xlu0 %v86, 96
    %v96 = vpop.permute.xlu0 %95
    %97 = vrot.lane.b32.xlu0 %v89, 96
    %v98 = vpop.permute.xlu0 %97
    %101 = vst.msk [vmem:[#allocation8] sm:$0xff] %vm61, %v96
    %102 = vst.msk [vmem:[#allocation8 + $0x8] sm:$0xff] %vm61, %v98
    %103 = vrot.lane.b32.xlu0 %v86, 64
    %v104 = vpop.permute.xlu0 %103
    %105 = vrot.lane.b32.xlu0 %v89, 64
    %v106 = vpop.permute.xlu0 %105
    %109 = vst.msk [vmem:[#allocation10] sm:$0xff] %vm61, %v104
    %110 = vst.msk [vmem:[#allocation10 + $0x8] sm:$0xff] %vm61, %v106
    // Predicated region
    $region22: #{tpu_custom_call.1} parent=1 // pred_check
      _
    $region23: #{tpu_custom_call.1} parent=1 // pred_check_branch
      %112 = sbr.rel (0) target = $region25
    $region24: #{tpu_custom_call.1} parent=1 // pred_region
      %114 = vsyncadd [#allocation4], 0
      %s115 = sshll.u32 [#allocation7], 4
      %s116 = int_to_ptr.vmem [resolvable:$true] %s115
      %s117 = sshll.u32 %s3, 4
      %s118 = int_to_ptr.hbm [resolvable:$true] %s117
      %123 = dma.vmem_to_hbm [thread:$0]  %s116, 256, %s118, [#allocation4], 128, 128, 8
    $region25: #{tpu_custom_call.1} parent=1 // pred_fallthru
      _
    // Predicated region
    $region26: #{tpu_custom_call.1} parent=1 // pred_check
      _
    $region27: #{tpu_custom_call.1} parent=1 // pred_check_branch
      %125 = sbr.rel (0) target = $region29
    $region28: #{tpu_custom_call.1} parent=1 // pred_region
      %127 = vsyncadd [#allocation9], 0
      %s128 = sshll.u32 [#allocation8], 4
      %s129 = int_to_ptr.vmem [resolvable:$true] %s128
      %s130 = sshll.u32 %s4, 4
      %s131 = int_to_ptr.hbm [resolvable:$true] %s130
      %136 = dma.vmem_to_hbm [thread:$0]  %s129, 256, %s131, [#allocation9], 128, 128, 8
    $region29: #{tpu_custom_call.1} parent=1 // pred_fallthru
      _
    // Predicated region
    $region30: #{tpu_custom_call.1} parent=1 // pred_check
      _
    $region31: #{tpu_custom_call.1} parent=1 // pred_check_branch
      %138 = sbr.rel (0) target = $region33
    $region32: #{tpu_custom_call.1} parent=1 // pred_region
      %140 = vsyncadd [#allocation9], 0
      %s141 = sshll.u32 [#allocation10], 4
      %s142 = int_to_ptr.vmem [resolvable:$true] %s141
      %s143 = sshll.u32 %s5, 4
      %s144 = int_to_ptr.hbm [resolvable:$true] %s143
      %149 = dma.vmem_to_hbm [thread:$0]  %s142, 256, %s144, [#allocation9], 128, 128, 8
    $region33: #{tpu_custom_call.1} parent=1 // pred_fallthru
      _
    // Predicated region
    $region34: #{tpu_custom_call.1} parent=1 // pred_check
      _
    $region35: #{tpu_custom_call.1} parent=1 // pred_check_branch
      %151 = sbr.rel (0) target = $region37
    $region36: #{tpu_custom_call.1} parent=1 // pred_region
      %153 = dma.done [#allocation4], 256
    $region37: #{tpu_custom_call.1} parent=1 // pred_fallthru
      _
    // Predicated region
    $region38: #{tpu_custom_call.1} parent=1 // pred_check
      _
    $region39: #{tpu_custom_call.1} parent=1 // pred_check_branch
      %155 = sbr.rel (0) target = $region41
    $region40: #{tpu_custom_call.1} parent=1 // pred_region
      %157 = dma.done [#allocation9], 256
    $region41: #{tpu_custom_call.1} parent=1 // pred_fallthru
      _
    // Predicated region
    $region42: #{tpu_custom_call.1} parent=1 // pred_check
      _
    $region43: #{tpu_custom_call.1} parent=1 // pred_check_branch
      %159 = sbr.rel (0) target = $region45
    $region44: #{tpu_custom_call.1} parent=1 // pred_region
      %161 = dma.done [#allocation9], 256
    $region45: #{tpu_custom_call.1} parent=1 // pred_fallthru
      _
    %162 = vsyncpa [#allocation3], 1
    %163 = vsyncpa [#allocation6], 1
    %164 = vsyncpa [#allocation4], 1
    %165 = vsyncpa [#allocation9], 1

</llo_original>
